<compile_context>
chip_gen: v7x
topology: tpu7x:2x2x1
jax: 0.10.0
libtpu: 0.0.40
codegen_flags: <defaults>
</compile_context>

<pallas_src>
import numpy as np
import jax
import jax.numpy as jnp
from jax.experimental import pallas as pl
from jax.experimental.pallas import tpu as pltpu

_LANE = 128
_SUBLANE = 8


def _partial_rows_max(val):
    """Reduce (K, TA) over the candidate (sublane) axis -> (1, TA).

    Tile-combine across sublane groups with plain VPU maxes, then one
    cross-sublane (XLU) reduce, instead of a single big cross-sublane reduce.
    """
    k, ta = val.shape
    if k % _SUBLANE == 0 and k > _SUBLANE:
        val = jnp.max(val.reshape(k // _SUBLANE, _SUBLANE, ta), axis=0)  # VPU only
    return jnp.max(val, axis=0, keepdims=True)  # single cross-sublane reduce


def _mdc_kernel_folded(d_ref, fmt_ref, out_ref):
    """Candidate axis fully resident (2-D grid: out-pixel tiles x bc tiles).

    d_ref   : (N, TA)     f32 -- D[k, a] = -sqrt(dist(pixel k, pixel a))
    fmt_ref : (N, BCT)    f32 -- feature values, candidate pixels on sublanes
    out_ref : (BCT, TA)   f32
    """
    bct = out_ref.shape[0]
    for t in range(bct):                      # small static unroll over the bc tile
        val = d_ref[...] - fmt_ref[:, t:t + 1]          # (N, TA) broadcast subtract
        out_ref[t:t + 1, :] = _partial_rows_max(val)


def _mdc_kernel_acc(d_ref, fmt_ref, out_ref):
    """Large-N fallback: candidate axis tiled over the innermost ("arbitrary") dim.

    Same layout as above but with TK candidate rows per step; out_ref is the
    running max, resident across the candidate grid axis.
    """
    @pl.when(pl.program_id(2) == 0)
    def _():
        out_ref[...] = jnp.full(out_ref.shape, -jnp.inf, dtype=out_ref.dtype)

    bct = out_ref.shape[0]
    for t in range(bct):
        val = d_ref[...] - fmt_ref[:, t:t + 1]
        out_ref[t:t + 1, :] = jnp.maximum(out_ref[t:t + 1, :],
                                          _partial_rows_max(val))


def _pick_bc_tile(bc):
    for t in (16, 8):
        if bc % t == 0:
            return t
    if bc <= 16:
        return bc
    for t in range(16, 0, -1):
        if bc % t == 0:
            return t
    return 1


def _pick_tiles(n, vmem_block_budget_bytes=6 << 20):
    """Pick (out-pixel lane tile TA, candidate sublane tile TK)."""
    ta = None
    for cand in (1024, 512, 384, 256, 128):
        if cand <= n and n % cand == 0:
            ta = cand
            break
    if ta is None:
        ta = n                      # full dim is always a legal block
    budget_elems = vmem_block_budget_bytes // 4
    if n * ta <= budget_elems:
        tk = n                      # fold the whole candidate axis into the body
    else:
        tk = None
        for cand in (8192, 4096, 2048, 1024, 512, 256, 128, 64, 32, 16, 8):
            if cand < n and n % cand == 0 and cand * ta <= budget_elems:
                tk = cand
                break
        if tk is None:
            tk = n                  # no clean divisor; rely on the raised vmem limit
    return ta, tk


def _vmem_bytes_estimate(tk, ta, bct):
    d_blk = tk * ta * 4
    fm_blk = tk * max(bct, _LANE) * 4            # lane dim pads to 128
    out_blk = max(bct, _SUBLANE) * ta * 4
    # double-buffered pipeline copies + in-kernel (TK, TA) temp + partials
    return 2 * (d_blk + fm_blk + out_blk) + d_blk + _SUBLANE * ta * 4


def min_distance_conv(feature_map, *, out_tile=None, cand_tile=None, bc_tile=None):
    """JAX/Pallas equivalent of MinDistanceConvLayer2.forward.

    feature_map: (B, C, H, W).  kernel_size of the PyTorch module is unused by
    its forward pass (border_size is computed but never applied).
    """
    B, C, H, W = feature_map.shape
    BC, N = B * C, H * W
    fm = feature_map.astype(jnp.float32).reshape(BC, N)

    # ---- Pairwise -distance matrix, computed once, shared by every (b, c). ----
    # D[k, a] = -sqrt((row_k - row_a)^2 + (col_k - col_a)^2)
    idx = jnp.arange(N, dtype=jnp.int32)
    r = (idx // W).astype(jnp.float32)
    c = (idx % W).astype(jnp.float32)
    dr = r[:, None] - r[None, :]
    dc = c[:, None] - c[None, :]
    neg_dist = -jnp.sqrt(dr * dr + dc * dc)                       # (N, N)
    # TODO(synk): for images where the N x N distance matrix no longer fits in
    # HBM, fall back to on-the-fly distance tiles (MXU cross-term trick).

    # ---- Tile selection --------------------------------------------------------
    bct = bc_tile if bc_tile is not None else _pick_bc_tile(BC)
    assert BC % bct == 0, "bc_tile must divide B*C"
    g = BC // bct

    ta_def, tk_def = _pick_tiles(N)
    ta = out_tile if out_tile is not None else ta_def
    tk = cand_tile if cand_tile is not None else tk_def
    assert N % ta == 0 and (ta % _LANE == 0 or ta == N), "bad out_tile"
    assert N % tk == 0 and (tk % _SUBLANE == 0 or tk == N), "bad cand_tile"
    k_steps = N // tk

    # Feature map with candidate pixels on sublanes and the bc tile on lanes.
    fmt3 = fm.reshape(g, bct, N).transpose(0, 2, 1)               # (G, N, BCT)

    vmem_limit = int(min(max(2 * _vmem_bytes_estimate(tk, ta, bct), 32 << 20),
                         48 << 20))

    if k_steps == 1:
        # 2-D grid, both axes parallel; candidate axis folded into the body.
        # Out-pixel tiles lead (keeps both v7x TensorCores busy); the inner bc
        # sweep reuses the resident (N, TA) distance block without re-DMA.
        grid = (N // ta, g)
        kernel = _mdc_kernel_folded
        in_specs = [
            pl.BlockSpec((N, ta), lambda a, gg: (0, a)),
            pl.BlockSpec((None, N, bct), lambda a, gg: (gg, 0, 0)),
        ]
        out_spec = pl.BlockSpec((None, bct, ta), lambda a, gg: (gg, 0, a))
        dims = ("parallel", "parallel")
    else:
        # Large-N fallback: candidate axis as innermost "arbitrary" grid dim,
        # output block is the running-max accumulator.
        grid = (N // ta, g, k_steps)
        kernel = _mdc_kernel_acc
        in_specs = [
            pl.BlockSpec((tk, ta), lambda a, gg, k: (k, a)),
            pl.BlockSpec((None, tk, bct), lambda a, gg, k: (gg, k, 0)),
        ]
        out_spec = pl.BlockSpec((None, bct, ta), lambda a, gg, k: (gg, 0, a))
        dims = ("parallel", "parallel", "arbitrary")

    out = pl.pallas_call(
        kernel,
        out_shape=jax.ShapeDtypeStruct((g, bct, N), jnp.float32),
        grid=grid,
        in_specs=in_specs,
        out_specs=out_spec,
        compiler_params=pltpu.CompilerParams(
            dimension_semantics=dims, vmem_limit_bytes=vmem_limit),
    )(neg_dist, fmt3)

    return out.reshape(B, C, H, W)


if __name__ == "__main__":
    key = jax.random.PRNGKey(0)
    B, C, H, W = 2, 1, 16, 16          # feature_size = 16, (B, 1, H, W) per docstring
    feature_map = jax.random.uniform(key, (B, C, H, W), dtype=jnp.float32)

    # Pure-numpy reference (mirrors the PyTorch quadruple loop, vectorized).
    fm_np = np.asarray(feature_map, dtype=np.float32)
    ii = np.arange(H, dtype=np.float32)
    jj = np.arange(W, dtype=np.float32)
    di = ii[:, None, None, None] - ii[None, None, :, None]      # (H, 1, H, 1): i - p
    dj = jj[None, :, None, None] - jj[None, None, None, :]      # (1, W, 1, W): j - q
    dist = np.sqrt(di * di + dj * dj)                           # (H, W, H, W)
    ref = np.empty((B, C, H, W), np.float32)
    for b in range(B):
        for c in range(C):
            ref[b, c] = np.max(-dist - fm_np[b, c][None, None, :, :], axis=(2, 3))

    # Default path: single invocation, candidate axis folded into the body.
    out = jax.block_until_ready(min_distance_conv(feature_map))
    assert out.shape == (B, C, H, W)
    assert np.allclose(np.asarray(out), ref, rtol=1e-5, atol=1e-4), \
        "folded-path mismatch vs reference"

    # Also exercise the large-N fallback (chunked candidate axis + accumulator).
    out2 = jax.block_until_ready(
        min_distance_conv(feature_map, out_tile=128, cand_tile=64))
    assert np.allclose(np.asarray(out2), ref, rtol=1e-5, atol=1e-4), \
        "chunked-path mismatch vs reference"

    print("KERNEL_OK")
</pallas_src>

<mosaic_0001>
module attributes {stable_mosaic.version = 11 : i64} {
  func.func @_mdc_kernel_folded(%arg0: i32, %arg1: i32, %arg2: memref<256x256xf32, #tpu.memory_space<vmem>>, %arg3: memref<1x256x2xf32, #tpu.memory_space<vmem>>, %arg4: memref<1x2x256xf32, #tpu.memory_space<vmem>>) attributes {dimension_semantics = [#tpu.dimension_semantics<parallel>, #tpu.dimension_semantics<parallel>], iteration_bounds = array<i64: 1, 1>, scalar_prefetch = 0 : i64, scratch_operands = 0 : i64, tpu.core_type = #tpu.core_type<tc>, window_params = [{transform_indices = @transform_0, window_bounds = array<i64: 256, 256>}, {transform_indices = @transform_1, window_bounds = array<i64: 1, 256, 2>}, {transform_indices = @transform_2, window_bounds = array<i64: 1, 2, 256>}]} {
    %c0 = arith.constant 0 : index
    %c0_0 = arith.constant 0 : index
    %0 = vector.load %arg2[%c0, %c0_0] : memref<256x256xf32, #tpu.memory_space<vmem>>, vector<256x256xf32>
    %c0_1 = arith.constant 0 : index
    %c0_2 = arith.constant 0 : index
    %c0_3 = arith.constant 0 : index
    %1 = vector.load %arg3[%c0_1, %c0_2, %c0_3] : memref<1x256x2xf32, #tpu.memory_space<vmem>>, vector<1x256x1xf32>
    %2 = vector.shape_cast %1 : vector<1x256x1xf32> to vector<256x1xf32>
    %3 = vector.broadcast %2 : vector<256x1xf32> to vector<256x256xf32>
    %4 = arith.subf %0, %3 : vector<256x256xf32>
    %5 = vector.shape_cast %4 : vector<256x256xf32> to vector<32x8x256xf32>
    %cst = arith.constant dense<0xFF800000> : vector<8x256xf32>
    %6 = vector.multi_reduction <maximumf>, %5, %cst [0] : vector<32x8x256xf32> to vector<8x256xf32>
    %cst_4 = arith.constant dense<0xFF800000> : vector<256xf32>
    %7 = vector.multi_reduction <maximumf>, %6, %cst_4 [0] : vector<8x256xf32> to vector<256xf32>
    %8 = vector.shape_cast %7 : vector<256xf32> to vector<1x256xf32>
    %c0_5 = arith.constant 0 : index
    %c0_6 = arith.constant 0 : index
    %c0_7 = arith.constant 0 : index
    %9 = vector.load %arg4[%c0_5, %c0_6, %c0_7] : memref<1x2x256xf32, #tpu.memory_space<vmem>>, vector<1x1x256xf32>
    %10 = vector.shape_cast %9 : vector<1x1x256xf32> to vector<1x256xf32>
    %11 = vector.shape_cast %8 : vector<1x256xf32> to vector<1x1x256xf32>
    tpu.vector_store %arg4[%c0_5, %c0_6, %c0_7], %11 {strides = array<i32>} : memref<1x2x256xf32, #tpu.memory_space<vmem>>, vector<1x1x256xf32>,
    %c0_8 = arith.constant 0 : index
    %c0_9 = arith.constant 0 : index
    %12 = vector.load %arg2[%c0_8, %c0_9] : memref<256x256xf32, #tpu.memory_space<vmem>>, vector<256x256xf32>
    %c0_10 = arith.constant 0 : index
    %c0_11 = arith.constant 0 : index
    %c1 = arith.constant 1 : index
    %13 = vector.load %arg3[%c0_10, %c0_11, %c1] : memref<1x256x2xf32, #tpu.memory_space<vmem>>, vector<1x256x1xf32>
    %14 = vector.shape_cast %13 : vector<1x256x1xf32> to vector<256x1xf32>
    %15 = vector.broadcast %14 : vector<256x1xf32> to vector<256x256xf32>
    %16 = arith.subf %12, %15 : vector<256x256xf32>
    %17 = vector.shape_cast %16 : vector<256x256xf32> to vector<32x8x256xf32>
    %cst_12 = arith.constant dense<0xFF800000> : vector<8x256xf32>
    %18 = vector.multi_reduction <maximumf>, %17, %cst_12 [0] : vector<32x8x256xf32> to vector<8x256xf32>
    %cst_13 = arith.constant dense<0xFF800000> : vector<256xf32>
    %19 = vector.multi_reduction <maximumf>, %18, %cst_13 [0] : vector<8x256xf32> to vector<256xf32>
    %20 = vector.shape_cast %19 : vector<256xf32> to vector<1x256xf32>
    %c0_14 = arith.constant 0 : index
    %c1_15 = arith.constant 1 : index
    %c0_16 = arith.constant 0 : index
    %21 = vector.load %arg4[%c0_14, %c1_15, %c0_16] : memref<1x2x256xf32, #tpu.memory_space<vmem>>, vector<1x1x256xf32>
    %22 = vector.shape_cast %21 : vector<1x1x256xf32> to vector<1x256xf32>
    %23 = vector.shape_cast %20 : vector<1x256xf32> to vector<1x1x256xf32>
    tpu.vector_store %arg4[%c0_14, %c1_15, %c0_16], %23 {strides = array<i32>} : memref<1x2x256xf32, #tpu.memory_space<vmem>>, vector<1x1x256xf32>,
    return
  }
  func.func @transform_0(%arg0: i32, %arg1: i32) -> (i32, i32) {
    %c0_i32 = arith.constant 0 : i32
    %c0_i32_0 = arith.constant 0 : i32
    return %c0_i32, %arg0 : i32, i32
  }
  func.func @transform_1(%arg0: i32, %arg1: i32) -> (i32, i32, i32) {
    %c0_i32 = arith.constant 0 : i32
    %c0_i32_0 = arith.constant 0 : i32
    %c0_i32_1 = arith.constant 0 : i32
    return %arg1, %c0_i32, %c0_i32_0 : i32, i32, i32
  }
  func.func @transform_2(%arg0: i32, %arg1: i32) -> (i32, i32, i32) {
    %c0_i32 = arith.constant 0 : i32
    %c0_i32_0 = arith.constant 0 : i32
    return %arg1, %c0_i32, %arg0 : i32, i32, i32
  }
}

</mosaic_0001>

<llo_original>
// kernel: tpu_custom_call.1
$region0: #{tpu_custom_call.1}
  #allocation0 [shape = 'u32[]', space=smem, size = 0x4, offset = 0x4, fixed_abs, tag = 'smem constant byte address 0x4 - core index']
  #allocation1 [shape = 'u32[144,128]{1,0:T(1,128)}', space=vmem, size = 0x12000, scoped, tag = 'internal scratch']
  %s0 = inlined_call_operand.hbm [shape: f32[256,256], index: 0, kind: input, shape index: {}]
  %s1 = inlined_call_operand.vmem [shape: f32[1,256,2], index: 1, kind: input, shape index: {}]
  %s2 = inlined_call_operand.hbm [shape: f32[1,2,256], index: 2, kind: output, shape index: {}]
  %s3 = sld [smem:[#allocation0]]
  $region22: #{tpu_custom_call.1} parent=0
    _
  %s5 = ssub.s32 1, %s3
  %s6 = scalar_select 0, %s5, %s3
  $region1: #{tpu_custom_call.1} parent=0
    #allocation2 [shape = 'u8[262144]{0}', space=vmem, size = 0x40000, scoped, tag = 'input window, operand 0, single buffered']
    #allocation3 [shape = 's32[1]{0}', space=sflag, size = 0x4, scoped, tag = 'scoped memory for tpu_custom_call.1']
    #allocation4 [shape = 's32[1]{0}', space=sflag, size = 0x4, scoped, tag = 'scoped memory for tpu_custom_call.1']
    #allocation5 [shape = 'u8[2048]{0}', space=vmem, size = 0x800, scoped, tag = 'output window, operand 0, single buffered']
    %7 = vsyncpa [#allocation3], 0
    %8 = vsyncpa [#allocation4], 0
    // Predicated region
    $region2: #{tpu_custom_call.1} parent=1 // pred_check
      _
    $region3: #{tpu_custom_call.1} parent=1 // pred_check_branch
      %10 = sbr.rel (0) target = $region5
    $region4: #{tpu_custom_call.1} parent=1 // pred_region
      %s12 = ssub.s32 8192, 8192
      %13 = vsyncadd [#allocation3], %s12
      %s14 = sshll.u32 [#allocation2], 4
      %s15 = int_to_ptr.vmem [resolvable:$true] %s14
      %20 = dma.hbm_to_vmem [thread:$0]  %s0, 8192, %s15, [#allocation3], 256, 256, 16
    $region5: #{tpu_custom_call.1} parent=1 // pred_fallthru
      _
    // Predicated region
    $region6: #{tpu_custom_call.1} parent=1 // pred_check
      _
    $region7: #{tpu_custom_call.1} parent=1 // pred_check_branch
      %22 = sbr.rel (0) target = $region9
    $region8: #{tpu_custom_call.1} parent=1 // pred_region
      _
    $region9: #{tpu_custom_call.1} parent=1 // pred_fallthru
      _
    // Predicated region
    $region10: #{tpu_custom_call.1} parent=1 // pred_check
      _
    $region11: #{tpu_custom_call.1} parent=1 // pred_check_branch
      %24 = sbr.rel (0) target = $region13
    $region12: #{tpu_custom_call.1} parent=1 // pred_region
      %25 = dma.done [#allocation3], 8192
    $region13: #{tpu_custom_call.1} parent=1 // pred_fallthru
      _
    %v26 = vld [vmem:[#allocation2] sm:$0xff]
    %v27 = vld [vmem:[#allocation2 + $0x8] sm:$0xff]
    %v28 = vld [vmem:[#allocation2 + $0x10] sm:$0xff]
    %v29 = vld [vmem:[#allocation2 + $0x18] sm:$0xff]
    %v30 = vld [vmem:[#allocation2 + $0x20] sm:$0xff]
    %v31 = vld [vmem:[#allocation2 + $0x28] sm:$0xff]
    %v32 = vld [vmem:[#allocation2 + $0x30] sm:$0xff]
    %v33 = vld [vmem:[#allocation2 + $0x38] sm:$0xff]
    %v34 = vld [vmem:[#allocation2 + $0x40] sm:$0xff]
    %v35 = vld [vmem:[#allocation2 + $0x48] sm:$0xff]
    %v36 = vld [vmem:[#allocation2 + $0x50] sm:$0xff]
    %v37 = vld [vmem:[#allocation2 + $0x58] sm:$0xff]
    %v38 = vld [vmem:[#allocation2 + $0x60] sm:$0xff]
    %v39 = vld [vmem:[#allocation2 + $0x68] sm:$0xff]
    %v40 = vld [vmem:[#allocation2 + $0x70] sm:$0xff]
    %v41 = vld [vmem:[#allocation2 + $0x78] sm:$0xff]
    %v42 = vld [vmem:[#allocation2 + $0x80] sm:$0xff]
    %v43 = vld [vmem:[#allocation2 + $0x88] sm:$0xff]
    %v44 = vld [vmem:[#allocation2 + $0x90] sm:$0xff]
    %v45 = vld [vmem:[#allocation2 + $0x98] sm:$0xff]
    %v46 = vld [vmem:[#allocation2 + $0xa0] sm:$0xff]
    %v47 = vld [vmem:[#allocation2 + $0xa8] sm:$0xff]
    %v48 = vld [vmem:[#allocation2 + $0xb0] sm:$0xff]
    %v49 = vld [vmem:[#allocation2 + $0xb8] sm:$0xff]
    %v50 = vld [vmem:[#allocation2 + $0xc0] sm:$0xff]
    %v51 = vld [vmem:[#allocation2 + $0xc8] sm:$0xff]
    %v52 = vld [vmem:[#allocation2 + $0xd0] sm:$0xff]
    %v53 = vld [vmem:[#allocation2 + $0xd8] sm:$0xff]
    %v54 = vld [vmem:[#allocation2 + $0xe0] sm:$0xff]
    %v55 = vld [vmem:[#allocation2 + $0xe8] sm:$0xff]
    %v56 = vld [vmem:[#allocation2 + $0xf0] sm:$0xff]
    %v57 = vld [vmem:[#allocation2 + $0xf8] sm:$0xff]
    %v58 = vld [vmem:[#allocation2 + $0x100] sm:$0xff]
    %v59 = vld [vmem:[#allocation2 + $0x108] sm:$0xff]
    %v60 = vld [vmem:[#allocation2 + $0x110] sm:$0xff]
    %v61 = vld [vmem:[#allocation2 + $0x118] sm:$0xff]
    %v62 = vld [vmem:[#allocation2 + $0x120] sm:$0xff]
    %v63 = vld [vmem:[#allocation2 + $0x128] sm:$0xff]
    %v64 = vld [vmem:[#allocation2 + $0x130] sm:$0xff]
    %v65 = vld [vmem:[#allocation2 + $0x138] sm:$0xff]
    %v66 = vld [vmem:[#allocation2 + $0x140] sm:$0xff]
    %v67 = vld [vmem:[#allocation2 + $0x148] sm:$0xff]
    %v68 = vld [vmem:[#allocation2 + $0x150] sm:$0xff]
    %v69 = vld [vmem:[#allocation2 + $0x158] sm:$0xff]
    %v70 = vld [vmem:[#allocation2 + $0x160] sm:$0xff]
    %v71 = vld [vmem:[#allocation2 + $0x168] sm:$0xff]
    %v72 = vld [vmem:[#allocation2 + $0x170] sm:$0xff]
    %v73 = vld [vmem:[#allocation2 + $0x178] sm:$0xff]
    %v74 = vld [vmem:[#allocation2 + $0x180] sm:$0xff]
    %v75 = vld [vmem:[#allocation2 + $0x188] sm:$0xff]
    %v76 = vld [vmem:[#allocation2 + $0x190] sm:$0xff]
    %v77 = vld [vmem:[#allocation2 + $0x198] sm:$0xff]
    %v78 = vld [vmem:[#allocation2 + $0x1a0] sm:$0xff]
    %v79 = vld [vmem:[#allocation2 + $0x1a8] sm:$0xff]
    %v80 = vld [vmem:[#allocation2 + $0x1b0] sm:$0xff]
    %v81 = vld [vmem:[#allocation2 + $0x1b8] sm:$0xff]
    %v82 = vld [vmem:[#allocation2 + $0x1c0] sm:$0xff]
    %v83 = vld [vmem:[#allocation2 + $0x1c8] sm:$0xff]
    %v84 = vld [vmem:[#allocation2 + $0x1d0] sm:$0xff]
    %v85 = vld [vmem:[#allocation2 + $0x1d8] sm:$0xff]
    %v86 = vld [vmem:[#allocation2 + $0x1e0] sm:$0xff]
    %v87 = vld [vmem:[#allocation2 + $0x1e8] sm:$0xff]
    %v88 = vld [vmem:[#allocation2 + $0x1f0] sm:$0xff]
    %v89 = vld [vmem:[#allocation2 + $0x1f8] sm:$0xff]
    %v90 = vld [vmem:[%s1] sm:$0xff]
    %v91 = vld [vmem:[%s1 + $0x8] sm:$0xff]
    %v92 = vld [vmem:[%s1 + $0x10] sm:$0xff]
    %v93 = vld [vmem:[%s1 + $0x18] sm:$0xff]
    %v94 = vld [vmem:[%s1 + $0x20] sm:$0xff]
    %v95 = vld [vmem:[%s1 + $0x28] sm:$0xff]
    %v96 = vld [vmem:[%s1 + $0x30] sm:$0xff]
    %v97 = vld [vmem:[%s1 + $0x38] sm:$0xff]
    %v98 = vld [vmem:[%s1 + $0x40] sm:$0xff]
    %v99 = vld [vmem:[%s1 + $0x48] sm:$0xff]
    %v100 = vld [vmem:[%s1 + $0x50] sm:$0xff]
    %v101 = vld [vmem:[%s1 + $0x58] sm:$0xff]
    %v102 = vld [vmem:[%s1 + $0x60] sm:$0xff]
    %v103 = vld [vmem:[%s1 + $0x68] sm:$0xff]
    %v104 = vld [vmem:[%s1 + $0x70] sm:$0xff]
    %v105 = vld [vmem:[%s1 + $0x78] sm:$0xff]
    %v106 = vld [vmem:[%s1 + $0x80] sm:$0xff]
    %v107 = vld [vmem:[%s1 + $0x88] sm:$0xff]
    %v108 = vld [vmem:[%s1 + $0x90] sm:$0xff]
    %v109 = vld [vmem:[%s1 + $0x98] sm:$0xff]
    %v110 = vld [vmem:[%s1 + $0xa0] sm:$0xff]
    %v111 = vld [vmem:[%s1 + $0xa8] sm:$0xff]
    %v112 = vld [vmem:[%s1 + $0xb0] sm:$0xff]
    %v113 = vld [vmem:[%s1 + $0xb8] sm:$0xff]
    %v114 = vld [vmem:[%s1 + $0xc0] sm:$0xff]
    %v115 = vld [vmem:[%s1 + $0xc8] sm:$0xff]
    %v116 = vld [vmem:[%s1 + $0xd0] sm:$0xff]
    %v117 = vld [vmem:[%s1 + $0xd8] sm:$0xff]
    %v118 = vld [vmem:[%s1 + $0xe0] sm:$0xff]
    %v119 = vld [vmem:[%s1 + $0xe8] sm:$0xff]
    %v120 = vld [vmem:[%s1 + $0xf0] sm:$0xff]
    %v121 = vld [vmem:[%s1 + $0xf8] sm:$0xff]
    %123 = vset.pattern.permute.xlu0 0
    %124 = vperm.xlu0 %123, %v90
    %v125 = vpop.permute.xlu0 %124
    %128 = vset.pattern.permute.xlu0 0
    %129 = vperm.xlu0 %128, %v91
    %v130 = vpop.permute.xlu0 %129
    %133 = vset.pattern.permute.xlu0 0
    %134 = vperm.xlu0 %133, %v92
    %v135 = vpop.permute.xlu0 %134
    %138 = vset.pattern.permute.xlu0 0
    %139 = vperm.xlu0 %138, %v93
    %v140 = vpop.permute.xlu0 %139
    %143 = vset.pattern.permute.xlu0 0
    %144 = vperm.xlu0 %143, %v94
    %v145 = vpop.permute.xlu0 %144
    %148 = vset.pattern.permute.xlu0 0
    %149 = vperm.xlu0 %148, %v95
    %v150 = vpop.permute.xlu0 %149
    %153 = vset.pattern.permute.xlu0 0
    %154 = vperm.xlu0 %153, %v96
    %v155 = vpop.permute.xlu0 %154
    %158 = vset.pattern.permute.xlu0 0
    %159 = vperm.xlu0 %158, %v97
    %v160 = vpop.permute.xlu0 %159
    %163 = vset.pattern.permute.xlu0 0
    %164 = vperm.xlu0 %163, %v98
    %v165 = vpop.permute.xlu0 %164
    %168 = vset.pattern.permute.xlu0 0
    %169 = vperm.xlu0 %168, %v99
    %v170 = vpop.permute.xlu0 %169
    %173 = vset.pattern.permute.xlu0 0
    %174 = vperm.xlu0 %173, %v100
    %v175 = vpop.permute.xlu0 %174
    %178 = vset.pattern.permute.xlu0 0
    %179 = vperm.xlu0 %178, %v101
    %v180 = vpop.permute.xlu0 %179
    %183 = vset.pattern.permute.xlu0 0
    %184 = vperm.xlu0 %183, %v102
    %v185 = vpop.permute.xlu0 %184
    %188 = vset.pattern.permute.xlu0 0
    %189 = vperm.xlu0 %188, %v103
    %v190 = vpop.permute.xlu0 %189
    %193 = vset.pattern.permute.xlu0 0
    %194 = vperm.xlu0 %193, %v104
    %v195 = vpop.permute.xlu0 %194
    %198 = vset.pattern.permute.xlu0 0
    %199 = vperm.xlu0 %198, %v105
    %v200 = vpop.permute.xlu0 %199
    %203 = vset.pattern.permute.xlu0 0
    %204 = vperm.xlu0 %203, %v106
    %v205 = vpop.permute.xlu0 %204
    %208 = vset.pattern.permute.xlu0 0
    %209 = vperm.xlu0 %208, %v107
    %v210 = vpop.permute.xlu0 %209
    %213 = vset.pattern.permute.xlu0 0
    %214 = vperm.xlu0 %213, %v108
    %v215 = vpop.permute.xlu0 %214
    %218 = vset.pattern.permute.xlu0 0
    %219 = vperm.xlu0 %218, %v109
    %v220 = vpop.permute.xlu0 %219
    %223 = vset.pattern.permute.xlu0 0
    %224 = vperm.xlu0 %223, %v110
    %v225 = vpop.permute.xlu0 %224
    %228 = vset.pattern.permute.xlu0 0
    %229 = vperm.xlu0 %228, %v111
    %v230 = vpop.permute.xlu0 %229
    %233 = vset.pattern.permute.xlu0 0
    %234 = vperm.xlu0 %233, %v112
    %v235 = vpop.permute.xlu0 %234
    %238 = vset.pattern.permute.xlu0 0
    %239 = vperm.xlu0 %238, %v113
    %v240 = vpop.permute.xlu0 %239
    %243 = vset.pattern.permute.xlu0 0
    %244 = vperm.xlu0 %243, %v114
    %v245 = vpop.permute.xlu0 %244
    %248 = vset.pattern.permute.xlu0 0
    %249 = vperm.xlu0 %248, %v115
    %v250 = vpop.permute.xlu0 %249
    %253 = vset.pattern.permute.xlu0 0
    %254 = vperm.xlu0 %253, %v116
    %v255 = vpop.permute.xlu0 %254
    %258 = vset.pattern.permute.xlu0 0
    %259 = vperm.xlu0 %258, %v117
    %v260 = vpop.permute.xlu0 %259
    %263 = vset.pattern.permute.xlu0 0
    %264 = vperm.xlu0 %263, %v118
    %v265 = vpop.permute.xlu0 %264
    %268 = vset.pattern.permute.xlu0 0
    %269 = vperm.xlu0 %268, %v119
    %v270 = vpop.permute.xlu0 %269
    %273 = vset.pattern.permute.xlu0 0
    %274 = vperm.xlu0 %273, %v120
    %v275 = vpop.permute.xlu0 %274
    %278 = vset.pattern.permute.xlu0 0
    %279 = vperm.xlu0 %278, %v121
    %v280 = vpop.permute.xlu0 %279
    %v282 = vsub.f32 %v26, %v125
    %v283 = vsub.f32 %v27, %v125
    %v284 = vsub.f32 %v28, %v130
    %v285 = vsub.f32 %v29, %v130
    %v286 = vsub.f32 %v30, %v135
    %v287 = vsub.f32 %v31, %v135
    %v288 = vsub.f32 %v32, %v140
    %v289 = vsub.f32 %v33, %v140
    %v290 = vsub.f32 %v34, %v145
    %v291 = vsub.f32 %v35, %v145
    %v292 = vsub.f32 %v36, %v150
    %v293 = vsub.f32 %v37, %v150
    %v294 = vsub.f32 %v38, %v155
    %v295 = vsub.f32 %v39, %v155
    %v296 = vsub.f32 %v40, %v160
    %v297 = vsub.f32 %v41, %v160
    %v298 = vsub.f32 %v42, %v165
    %v299 = vsub.f32 %v43, %v165
    %v300 = vsub.f32 %v44, %v170
    %v301 = vsub.f32 %v45, %v170
    %v302 = vsub.f32 %v46, %v175
    %v303 = vsub.f32 %v47, %v175
    %v304 = vsub.f32 %v48, %v180
    %v305 = vsub.f32 %v49, %v180
    %v306 = vsub.f32 %v50, %v185
    %v307 = vsub.f32 %v51, %v185
    %v308 = vsub.f32 %v52, %v190
    %v309 = vsub.f32 %v53, %v190
    %v310 = vsub.f32 %v54, %v195
    %v311 = vsub.f32 %v55, %v195
    %v312 = vsub.f32 %v56, %v200
    %v313 = vsub.f32 %v57, %v200
    %v314 = vsub.f32 %v58, %v205
    %v315 = vsub.f32 %v59, %v205
    %v316 = vsub.f32 %v60, %v210
    %v317 = vsub.f32 %v61, %v210
    %v318 = vsub.f32 %v62, %v215
    %v319 = vsub.f32 %v63, %v215
    %v320 = vsub.f32 %v64, %v220
    %v321 = vsub.f32 %v65, %v220
    %v322 = vsub.f32 %v66, %v225
    %v323 = vsub.f32 %v67, %v225
    %v324 = vsub.f32 %v68, %v230
    %v325 = vsub.f32 %v69, %v230
    %v326 = vsub.f32 %v70, %v235
    %v327 = vsub.f32 %v71, %v235
    %v328 = vsub.f32 %v72, %v240
    %v329 = vsub.f32 %v73, %v240
    %v330 = vsub.f32 %v74, %v245
    %v331 = vsub.f32 %v75, %v245
    %v332 = vsub.f32 %v76, %v250
    %v333 = vsub.f32 %v77, %v250
    %v334 = vsub.f32 %v78, %v255
    %v335 = vsub.f32 %v79, %v255
    %v336 = vsub.f32 %v80, %v260
    %v337 = vsub.f32 %v81, %v260
    %v338 = vsub.f32 %v82, %v265
    %v339 = vsub.f32 %v83, %v265
    %v340 = vsub.f32 %v84, %v270
    %v341 = vsub.f32 %v85, %v270
    %v342 = vsub.f32 %v86, %v275
    %v343 = vsub.f32 %v87, %v275
    %v344 = vsub.f32 %v88, %v280
    %v345 = vsub.f32 %v89, %v280
    %v346 = vmax.f32 %v282, %v286
    %v347 = vmax.f32 %v284, %v288
    %v348 = vmax.f32 %v346, %v290
    %v349 = vmax.f32 %v347, %v292
    %v350 = vmax.f32 %v348, %v294
    %v351 = vmax.f32 %v349, %v296
    %v352 = vmax.f32 %v350, %v298
    %v353 = vmax.f32 %v351, %v300
    %v354 = vmax.f32 %v352, %v302
    %v355 = vmax.f32 %v353, %v304
    %v356 = vmax.f32 %v354, %v306
    %v357 = vmax.f32 %v355, %v308
    %v358 = vmax.f32 %v356, %v310
    %v359 = vmax.f32 %v357, %v312
    %v360 = vmax.f32 %v358, %v314
    %v361 = vmax.f32 %v359, %v316
    %v362 = vmax.f32 %v360, %v318
    %v363 = vmax.f32 %v361, %v320
    %v364 = vmax.f32 %v362, %v322
    %v365 = vmax.f32 %v363, %v324
    %v366 = vmax.f32 %v364, %v326
    %v367 = vmax.f32 %v365, %v328
    %v368 = vmax.f32 %v366, %v330
    %v369 = vmax.f32 %v367, %v332
    %v370 = vmax.f32 %v368, %v334
    %v371 = vmax.f32 %v369, %v336
    %v372 = vmax.f32 %v370, %v338
    %v373 = vmax.f32 %v371, %v340
    %v374 = vmax.f32 %v372, %v342
    %v375 = vmax.f32 %v373, %v344
    %v376 = vmax.f32 %v374, %v375
    %v377 = vmax.f32 %v283, %v287
    %v378 = vmax.f32 %v285, %v289
    %v379 = vmax.f32 %v377, %v291
    %v380 = vmax.f32 %v378, %v293
    %v381 = vmax.f32 %v379, %v295
    %v382 = vmax.f32 %v380, %v297
    %v383 = vmax.f32 %v381, %v299
    %v384 = vmax.f32 %v382, %v301
    %v385 = vmax.f32 %v383, %v303
    %v386 = vmax.f32 %v384, %v305
    %v387 = vmax.f32 %v385, %v307
    %v388 = vmax.f32 %v386, %v309
    %v389 = vmax.f32 %v387, %v311
    %v390 = vmax.f32 %v388, %v313
    %v391 = vmax.f32 %v389, %v315
    %v392 = vmax.f32 %v390, %v317
    %v393 = vmax.f32 %v391, %v319
    %v394 = vmax.f32 %v392, %v321
    %v395 = vmax.f32 %v393, %v323
    %v396 = vmax.f32 %v394, %v325
    %v397 = vmax.f32 %v395, %v327
    %v398 = vmax.f32 %v396, %v329
    %v399 = vmax.f32 %v397, %v331
    %v400 = vmax.f32 %v398, %v333
    %v401 = vmax.f32 %v399, %v335
    %v402 = vmax.f32 %v400, %v337
    %v403 = vmax.f32 %v401, %v339
    %v404 = vmax.f32 %v402, %v341
    %v405 = vmax.f32 %v403, %v343
    %v406 = vmax.f32 %v404, %v345
    %v407 = vmax.f32 %v405, %v406
    %v408 = vrot.slane %v376, 4
    %v409 = vmax.f32 %v376, %v408
    %v410 = vrot.slane %v409, 2
    %v411 = vmax.f32 %v409, %v410
    %v412 = vrot.slane %v411, 1
    %v413 = vmax.f32 %v411, %v412
    %v414 = vrot.slane %v407, 4
    %v415 = vmax.f32 %v407, %v414
    %v416 = vrot.slane %v415, 2
    %v417 = vmax.f32 %v415, %v416
    %v418 = vrot.slane %v417, 1
    %v419 = vmax.f32 %v417, %v418
    %v422 = vcombine.low %v413, %v419
    %v424 = vunpack.c.l.s4 1966171168
    %v425 = vunpack.c.0.s8 %v424
    %v426 = vlaneseq
    %v427 = vshrl.u32 %v426, 7
    %v428 = vsub.s32 %v425, %v427
    %v429 = vrot.slane %v422, %v428
    %v431 = vunpack.c.l.s4 1966171168
    %v432 = vunpack.c.0.s8 %v431
    %v433 = vlaneseq
    %v434 = vshrl.u32 %v433, 7
    %v435 = vsub.s32 %v432, %v434
    %v436 = vrot.slane %v429, %v435
    %v438 = vlaneseq
    %vm439 = vcmp.ge.s32.totalorder %v438, 0
    %vm440 = vcmp.lt.s32.totalorder %v438, 256
    %vm441 = vmand %vm439, %vm440
    %442 = vst.msk [vmem:[#allocation5] ss:$2 sm:$0x3] %vm441, %v436
    %v443 = vld [vmem:[#allocation2] sm:$0xff]
    %v444 = vld [vmem:[#allocation2 + $0x8] sm:$0xff]
    %v445 = vld [vmem:[#allocation2 + $0x10] sm:$0xff]
    %v446 = vld [vmem:[#allocation2 + $0x18] sm:$0xff]
    %v447 = vld [vmem:[#allocation2 + $0x20] sm:$0xff]
    %v448 = vld [vmem:[#allocation2 + $0x28] sm:$0xff]
    %v449 = vld [vmem:[#allocation2 + $0x30] sm:$0xff]
    %v450 = vld [vmem:[#allocation2 + $0x38] sm:$0xff]
    %v451 = vld [vmem:[#allocation2 + $0x40] sm:$0xff]
    %v452 = vld [vmem:[#allocation2 + $0x48] sm:$0xff]
    %v453 = vld [vmem:[#allocation2 + $0x50] sm:$0xff]
    %v454 = vld [vmem:[#allocation2 + $0x58] sm:$0xff]
    %v455 = vld [vmem:[#allocation2 + $0x60] sm:$0xff]
    %v456 = vld [vmem:[#allocation2 + $0x68] sm:$0xff]
    %v457 = vld [vmem:[#allocation2 + $0x70] sm:$0xff]
    %v458 = vld [vmem:[#allocation2 + $0x78] sm:$0xff]
    %v459 = vld [vmem:[#allocation2 + $0x80] sm:$0xff]
    %v460 = vld [vmem:[#allocation2 + $0x88] sm:$0xff]
    %v461 = vld [vmem:[#allocation2 + $0x90] sm:$0xff]
    %v462 = vld [vmem:[#allocation2 + $0x98] sm:$0xff]
    %v463 = vld [vmem:[#allocation2 + $0xa0] sm:$0xff]
    %v464 = vld [vmem:[#allocation2 + $0xa8] sm:$0xff]
    %v465 = vld [vmem:[#allocation2 + $0xb0] sm:$0xff]
    %v466 = vld [vmem:[#allocation2 + $0xb8] sm:$0xff]
    %v467 = vld [vmem:[#allocation2 + $0xc0] sm:$0xff]
    %v468 = vld [vmem:[#allocation2 + $0xc8] sm:$0xff]
    %v469 = vld [vmem:[#allocation2 + $0xd0] sm:$0xff]
    %v470 = vld [vmem:[#allocation2 + $0xd8] sm:$0xff]
    %v471 = vld [vmem:[#allocation2 + $0xe0] sm:$0xff]
    %v472 = vld [vmem:[#allocation2 + $0xe8] sm:$0xff]
    %v473 = vld [vmem:[#allocation2 + $0xf0] sm:$0xff]
    %v474 = vld [vmem:[#allocation2 + $0xf8] sm:$0xff]
    %v475 = vld [vmem:[#allocation2 + $0x100] sm:$0xff]
    %v476 = vld [vmem:[#allocation2 + $0x108] sm:$0xff]
    %v477 = vld [vmem:[#allocation2 + $0x110] sm:$0xff]
    %v478 = vld [vmem:[#allocation2 + $0x118] sm:$0xff]
    %v479 = vld [vmem:[#allocation2 + $0x120] sm:$0xff]
    %v480 = vld [vmem:[#allocation2 + $0x128] sm:$0xff]
    %v481 = vld [vmem:[#allocation2 + $0x130] sm:$0xff]
    %v482 = vld [vmem:[#allocation2 + $0x138] sm:$0xff]
    %v483 = vld [vmem:[#allocation2 + $0x140] sm:$0xff]
    %v484 = vld [vmem:[#allocation2 + $0x148] sm:$0xff]
    %v485 = vld [vmem:[#allocation2 + $0x150] sm:$0xff]
    %v486 = vld [vmem:[#allocation2 + $0x158] sm:$0xff]
    %v487 = vld [vmem:[#allocation2 + $0x160] sm:$0xff]
    %v488 = vld [vmem:[#allocation2 + $0x168] sm:$0xff]
    %v489 = vld [vmem:[#allocation2 + $0x170] sm:$0xff]
    %v490 = vld [vmem:[#allocation2 + $0x178] sm:$0xff]
    %v491 = vld [vmem:[#allocation2 + $0x180] sm:$0xff]
    %v492 = vld [vmem:[#allocation2 + $0x188] sm:$0xff]
    %v493 = vld [vmem:[#allocation2 + $0x190] sm:$0xff]
    %v494 = vld [vmem:[#allocation2 + $0x198] sm:$0xff]
    %v495 = vld [vmem:[#allocation2 + $0x1a0] sm:$0xff]
    %v496 = vld [vmem:[#allocation2 + $0x1a8] sm:$0xff]
    %v497 = vld [vmem:[#allocation2 + $0x1b0] sm:$0xff]
    %v498 = vld [vmem:[#allocation2 + $0x1b8] sm:$0xff]
    %v499 = vld [vmem:[#allocation2 + $0x1c0] sm:$0xff]
    %v500 = vld [vmem:[#allocation2 + $0x1c8] sm:$0xff]
    %v501 = vld [vmem:[#allocation2 + $0x1d0] sm:$0xff]
    %v502 = vld [vmem:[#allocation2 + $0x1d8] sm:$0xff]
    %v503 = vld [vmem:[#allocation2 + $0x1e0] sm:$0xff]
    %v504 = vld [vmem:[#allocation2 + $0x1e8] sm:$0xff]
    %v505 = vld [vmem:[#allocation2 + $0x1f0] sm:$0xff]
    %v506 = vld [vmem:[#allocation2 + $0x1f8] sm:$0xff]
    %v507 = vld [vmem:[%s1] sm:$0xff]
    %v508 = vld [vmem:[%s1 + $0x8] sm:$0xff]
    %v509 = vld [vmem:[%s1 + $0x10] sm:$0xff]
    %v510 = vld [vmem:[%s1 + $0x18] sm:$0xff]
    %v511 = vld [vmem:[%s1 + $0x20] sm:$0xff]
    %v512 = vld [vmem:[%s1 + $0x28] sm:$0xff]
    %v513 = vld [vmem:[%s1 + $0x30] sm:$0xff]
    %v514 = vld [vmem:[%s1 + $0x38] sm:$0xff]
    %v515 = vld [vmem:[%s1 + $0x40] sm:$0xff]
    %v516 = vld [vmem:[%s1 + $0x48] sm:$0xff]
    %v517 = vld [vmem:[%s1 + $0x50] sm:$0xff]
    %v518 = vld [vmem:[%s1 + $0x58] sm:$0xff]
    %v519 = vld [vmem:[%s1 + $0x60] sm:$0xff]
    %v520 = vld [vmem:[%s1 + $0x68] sm:$0xff]
    %v521 = vld [vmem:[%s1 + $0x70] sm:$0xff]
    %v522 = vld [vmem:[%s1 + $0x78] sm:$0xff]
    %v523 = vld [vmem:[%s1 + $0x80] sm:$0xff]
    %v524 = vld [vmem:[%s1 + $0x88] sm:$0xff]
    %v525 = vld [vmem:[%s1 + $0x90] sm:$0xff]
    %v526 = vld [vmem:[%s1 + $0x98] sm:$0xff]
    %v527 = vld [vmem:[%s1 + $0xa0] sm:$0xff]
    %v528 = vld [vmem:[%s1 + $0xa8] sm:$0xff]
    %v529 = vld [vmem:[%s1 + $0xb0] sm:$0xff]
    %v530 = vld [vmem:[%s1 + $0xb8] sm:$0xff]
    %v531 = vld [vmem:[%s1 + $0xc0] sm:$0xff]
    %v532 = vld [vmem:[%s1 + $0xc8] sm:$0xff]
    %v533 = vld [vmem:[%s1 + $0xd0] sm:$0xff]
    %v534 = vld [vmem:[%s1 + $0xd8] sm:$0xff]
    %v535 = vld [vmem:[%s1 + $0xe0] sm:$0xff]
    %v536 = vld [vmem:[%s1 + $0xe8] sm:$0xff]
    %v537 = vld [vmem:[%s1 + $0xf0] sm:$0xff]
    %v538 = vld [vmem:[%s1 + $0xf8] sm:$0xff]
    %540 = vset.pattern.permute.xlu0 1
    %541 = vperm.xlu0 %540, %v507
    %v542 = vpop.permute.xlu0 %541
    %545 = vset.pattern.permute.xlu0 1
    %546 = vperm.xlu0 %545, %v508
    %v547 = vpop.permute.xlu0 %546
    %550 = vset.pattern.permute.xlu0 1
    %551 = vperm.xlu0 %550, %v509
    %v552 = vpop.permute.xlu0 %551
    %555 = vset.pattern.permute.xlu0 1
    %556 = vperm.xlu0 %555, %v510
    %v557 = vpop.permute.xlu0 %556
    %560 = vset.pattern.permute.xlu0 1
    %561 = vperm.xlu0 %560, %v511
    %v562 = vpop.permute.xlu0 %561
    %565 = vset.pattern.permute.xlu0 1
    %566 = vperm.xlu0 %565, %v512
    %v567 = vpop.permute.xlu0 %566
    %570 = vset.pattern.permute.xlu0 1
    %571 = vperm.xlu0 %570, %v513
    %v572 = vpop.permute.xlu0 %571
    %575 = vset.pattern.permute.xlu0 1
    %576 = vperm.xlu0 %575, %v514
    %v577 = vpop.permute.xlu0 %576
    %580 = vset.pattern.permute.xlu0 1
    %581 = vperm.xlu0 %580, %v515
    %v582 = vpop.permute.xlu0 %581
    %585 = vset.pattern.permute.xlu0 1
    %586 = vperm.xlu0 %585, %v516
    %v587 = vpop.permute.xlu0 %586
    %590 = vset.pattern.permute.xlu0 1
    %591 = vperm.xlu0 %590, %v517
    %v592 = vpop.permute.xlu0 %591
    %595 = vset.pattern.permute.xlu0 1
    %596 = vperm.xlu0 %595, %v518
    %v597 = vpop.permute.xlu0 %596
    %600 = vset.pattern.permute.xlu0 1
    %601 = vperm.xlu0 %600, %v519
    %v602 = vpop.permute.xlu0 %601
    %605 = vset.pattern.permute.xlu0 1
    %606 = vperm.xlu0 %605, %v520
    %v607 = vpop.permute.xlu0 %606
    %610 = vset.pattern.permute.xlu0 1
    %611 = vperm.xlu0 %610, %v521
    %v612 = vpop.permute.xlu0 %611
    %615 = vset.pattern.permute.xlu0 1
    %616 = vperm.xlu0 %615, %v522
    %v617 = vpop.permute.xlu0 %616
    %620 = vset.pattern.permute.xlu0 1
    %621 = vperm.xlu0 %620, %v523
    %v622 = vpop.permute.xlu0 %621
    %625 = vset.pattern.permute.xlu0 1
    %626 = vperm.xlu0 %625, %v524
    %v627 = vpop.permute.xlu0 %626
    %630 = vset.pattern.permute.xlu0 1
    %631 = vperm.xlu0 %630, %v525
    %v632 = vpop.permute.xlu0 %631
    %635 = vset.pattern.permute.xlu0 1
    %636 = vperm.xlu0 %635, %v526
    %v637 = vpop.permute.xlu0 %636
    %640 = vset.pattern.permute.xlu0 1
    %641 = vperm.xlu0 %640, %v527
    %v642 = vpop.permute.xlu0 %641
    %645 = vset.pattern.permute.xlu0 1
    %646 = vperm.xlu0 %645, %v528
    %v647 = vpop.permute.xlu0 %646
    %650 = vset.pattern.permute.xlu0 1
    %651 = vperm.xlu0 %650, %v529
    %v652 = vpop.permute.xlu0 %651
    %655 = vset.pattern.permute.xlu0 1
    %656 = vperm.xlu0 %655, %v530
    %v657 = vpop.permute.xlu0 %656
    %660 = vset.pattern.permute.xlu0 1
    %661 = vperm.xlu0 %660, %v531
    %v662 = vpop.permute.xlu0 %661
    %665 = vset.pattern.permute.xlu0 1
    %666 = vperm.xlu0 %665, %v532
    %v667 = vpop.permute.xlu0 %666
    %670 = vset.pattern.permute.xlu0 1
    %671 = vperm.xlu0 %670, %v533
    %v672 = vpop.permute.xlu0 %671
    %675 = vset.pattern.permute.xlu0 1
    %676 = vperm.xlu0 %675, %v534
    %v677 = vpop.permute.xlu0 %676
    %680 = vset.pattern.permute.xlu0 1
    %681 = vperm.xlu0 %680, %v535
    %v682 = vpop.permute.xlu0 %681
    %685 = vset.pattern.permute.xlu0 1
    %686 = vperm.xlu0 %685, %v536
    %v687 = vpop.permute.xlu0 %686
    %690 = vset.pattern.permute.xlu0 1
    %691 = vperm.xlu0 %690, %v537
    %v692 = vpop.permute.xlu0 %691
    %695 = vset.pattern.permute.xlu0 1
    %696 = vperm.xlu0 %695, %v538
    %v697 = vpop.permute.xlu0 %696
    %v699 = vsub.f32 %v443, %v542
    %v700 = vsub.f32 %v444, %v542
    %v701 = vsub.f32 %v445, %v547
    %v702 = vsub.f32 %v446, %v547
    %v703 = vsub.f32 %v447, %v552
    %v704 = vsub.f32 %v448, %v552
    %v705 = vsub.f32 %v449, %v557
    %v706 = vsub.f32 %v450, %v557
    %v707 = vsub.f32 %v451, %v562
    %v708 = vsub.f32 %v452, %v562
    %v709 = vsub.f32 %v453, %v567
    %v710 = vsub.f32 %v454, %v567
    %v711 = vsub.f32 %v455, %v572
    %v712 = vsub.f32 %v456, %v572
    %v713 = vsub.f32 %v457, %v577
    %v714 = vsub.f32 %v458, %v577
    %v715 = vsub.f32 %v459, %v582
    %v716 = vsub.f32 %v460, %v582
    %v717 = vsub.f32 %v461, %v587
    %v718 = vsub.f32 %v462, %v587
    %v719 = vsub.f32 %v463, %v592
    %v720 = vsub.f32 %v464, %v592
    %v721 = vsub.f32 %v465, %v597
    %v722 = vsub.f32 %v466, %v597
    %v723 = vsub.f32 %v467, %v602
    %v724 = vsub.f32 %v468, %v602
    %v725 = vsub.f32 %v469, %v607
    %v726 = vsub.f32 %v470, %v607
    %v727 = vsub.f32 %v471, %v612
    %v728 = vsub.f32 %v472, %v612
    %v729 = vsub.f32 %v473, %v617
    %v730 = vsub.f32 %v474, %v617
    %v731 = vsub.f32 %v475, %v622
    %v732 = vsub.f32 %v476, %v622
    %v733 = vsub.f32 %v477, %v627
    %v734 = vsub.f32 %v478, %v627
    %v735 = vsub.f32 %v479, %v632
    %v736 = vsub.f32 %v480, %v632
    %v737 = vsub.f32 %v481, %v637
    %v738 = vsub.f32 %v482, %v637
    %v739 = vsub.f32 %v483, %v642
    %v740 = vsub.f32 %v484, %v642
    %v741 = vsub.f32 %v485, %v647
    %v742 = vsub.f32 %v486, %v647
    %v743 = vsub.f32 %v487, %v652
    %v744 = vsub.f32 %v488, %v652
    %v745 = vsub.f32 %v489, %v657
    %v746 = vsub.f32 %v490, %v657
    %v747 = vsub.f32 %v491, %v662
    %v748 = vsub.f32 %v492, %v662
    %v749 = vsub.f32 %v493, %v667
    %v750 = vsub.f32 %v494, %v667
    %v751 = vsub.f32 %v495, %v672
    %v752 = vsub.f32 %v496, %v672
    %v753 = vsub.f32 %v497, %v677
    %v754 = vsub.f32 %v498, %v677
    %v755 = vsub.f32 %v499, %v682
    %v756 = vsub.f32 %v500, %v682
    %v757 = vsub.f32 %v501, %v687
    %v758 = vsub.f32 %v502, %v687
    %v759 = vsub.f32 %v503, %v692
    %v760 = vsub.f32 %v504, %v692
    %v761 = vsub.f32 %v505, %v697
    %v762 = vsub.f32 %v506, %v697
    %v763 = vmax.f32 %v699, %v703
    %v764 = vmax.f32 %v701, %v705
    %v765 = vmax.f32 %v763, %v707
    %v766 = vmax.f32 %v764, %v709
    %v767 = vmax.f32 %v765, %v711
    %v768 = vmax.f32 %v766, %v713
    %v769 = vmax.f32 %v767, %v715
    %v770 = vmax.f32 %v768, %v717
    %v771 = vmax.f32 %v769, %v719
    %v772 = vmax.f32 %v770, %v721
    %v773 = vmax.f32 %v771, %v723
    %v774 = vmax.f32 %v772, %v725
    %v775 = vmax.f32 %v773, %v727
    %v776 = vmax.f32 %v774, %v729
    %v777 = vmax.f32 %v775, %v731
    %v778 = vmax.f32 %v776, %v733
    %v779 = vmax.f32 %v777, %v735
    %v780 = vmax.f32 %v778, %v737
    %v781 = vmax.f32 %v779, %v739
    %v782 = vmax.f32 %v780, %v741
    %v783 = vmax.f32 %v781, %v743
    %v784 = vmax.f32 %v782, %v745
    %v785 = vmax.f32 %v783, %v747
    %v786 = vmax.f32 %v784, %v749
    %v787 = vmax.f32 %v785, %v751
    %v788 = vmax.f32 %v786, %v753
    %v789 = vmax.f32 %v787, %v755
    %v790 = vmax.f32 %v788, %v757
    %v791 = vmax.f32 %v789, %v759
    %v792 = vmax.f32 %v790, %v761
    %v793 = vmax.f32 %v791, %v792
    %v794 = vmax.f32 %v700, %v704
    %v795 = vmax.f32 %v702, %v706
    %v796 = vmax.f32 %v794, %v708
    %v797 = vmax.f32 %v795, %v710
    %v798 = vmax.f32 %v796, %v712
    %v799 = vmax.f32 %v797, %v714
    %v800 = vmax.f32 %v798, %v716
    %v801 = vmax.f32 %v799, %v718
    %v802 = vmax.f32 %v800, %v720
    %v803 = vmax.f32 %v801, %v722
    %v804 = vmax.f32 %v802, %v724
    %v805 = vmax.f32 %v803, %v726
    %v806 = vmax.f32 %v804, %v728
    %v807 = vmax.f32 %v805, %v730
    %v808 = vmax.f32 %v806, %v732
    %v809 = vmax.f32 %v807, %v734
    %v810 = vmax.f32 %v808, %v736
    %v811 = vmax.f32 %v809, %v738
    %v812 = vmax.f32 %v810, %v740
    %v813 = vmax.f32 %v811, %v742
    %v814 = vmax.f32 %v812, %v744
    %v815 = vmax.f32 %v813, %v746
    %v816 = vmax.f32 %v814, %v748
    %v817 = vmax.f32 %v815, %v750
    %v818 = vmax.f32 %v816, %v752
    %v819 = vmax.f32 %v817, %v754
    %v820 = vmax.f32 %v818, %v756
    %v821 = vmax.f32 %v819, %v758
    %v822 = vmax.f32 %v820, %v760
    %v823 = vmax.f32 %v821, %v762
    %v824 = vmax.f32 %v822, %v823
    %v825 = vrot.slane %v793, 4
    %v826 = vmax.f32 %v793, %v825
    %v827 = vrot.slane %v826, 2
    %v828 = vmax.f32 %v826, %v827
    %v829 = vrot.slane %v828, 1
    %v830 = vmax.f32 %v828, %v829
    %v831 = vrot.slane %v824, 4
    %v832 = vmax.f32 %v824, %v831
    %v833 = vrot.slane %v832, 2
    %v834 = vmax.f32 %v832, %v833
    %v835 = vrot.slane %v834, 1
    %v836 = vmax.f32 %v834, %v835
    %v839 = vcombine.low %v830, %v836
    %v841 = vunpack.c.l.s4 1966171168
    %v842 = vunpack.c.0.s8 %v841
    %v843 = vlaneseq
    %v844 = vshrl.u32 %v843, 7
    %v845 = vsub.s32 %v842, %v844
    %v846 = vrot.slane %v839, %v845
    %v848 = vunpack.c.l.s4 1966171168
    %v849 = vunpack.c.0.s8 %v848
    %v850 = vlaneseq
    %v851 = vshrl.u32 %v850, 7
    %v852 = vsub.s32 %v849, %v851
    %v853 = vrot.slane %v846, %v852
    %s855 = scalar_lea.vmem [#allocation5], 1
    %856 = vst.msk [vmem:[%s855] ss:$2 sm:$0x3] %vm441, %v853
    // Predicated region
    $region14: #{tpu_custom_call.1} parent=1 // pred_check
      _
    $region15: #{tpu_custom_call.1} parent=1 // pred_check_branch
      %858 = sbr.rel (0) target = $region17
    $region16: #{tpu_custom_call.1} parent=1 // pred_region
      %s860 = ssub.s32 64, 64
      %861 = vsyncadd [#allocation4], %s860
      %s863 = sshll.u32 [#allocation5], 4
      %s864 = int_to_ptr.vmem [resolvable:$true] %s863
      %866 = dma.vmem_to_hbm [thread:$0]  %s864, 64, %s2, [#allocation4]
    $region17: #{tpu_custom_call.1} parent=1 // pred_fallthru
      _
    // Predicated region
    $region18: #{tpu_custom_call.1} parent=1 // pred_check
      _
    $region19: #{tpu_custom_call.1} parent=1 // pred_check_branch
      %868 = sbr.rel (0) target = $region21
    $region20: #{tpu_custom_call.1} parent=1 // pred_region
      %869 = dma.done [#allocation4], 64
    $region21: #{tpu_custom_call.1} parent=1 // pred_fallthru
      _
    %870 = vsyncpa [#allocation3], 1
    %871 = vsyncpa [#allocation4], 1

</llo_original>
